<compile_context>
chip_gen: v5e
topology: v5e:2x2
jax: 0.10.0
libtpu: 0.0.40
codegen_flags: <defaults>
</compile_context>

<pallas_src>
import numpy as np
import jax
import jax.numpy as jnp
from jax.experimental import pallas as pl
from jax.experimental.pallas import tpu as pltpu


# --------------------------------------------------------------------------- kernels


def _pos3d_dense_kernel(xz_ref, y_ref, o_ref):
    # Lane-dense path (emb % 128 != 0): last dim is w*emb.
    #   xz_ref: (1, w*emb)   zero-placed x + z row for the current depth slice
    #   y_ref : (th, w*emb)  w-tiled, zero-placed y rows for the current h tile
    #   o_ref : (th, w*emb)
    o_ref[...] = (y_ref[...] + xz_ref[...]).astype(o_ref.dtype)


def _pos3d_wide_kernel(xz_ref, y_ref, o_ref):
    # Pre-aligned path (emb % 128 == 0): natural (d, h, w, emb) layout.
    #   xz_ref: (w, emb)     zero-placed x + z plane for the current depth slice
    #   y_ref : (th, emb)    zero-placed y rows for the current h tile
    #   o_ref : (th, w, emb)
    o_ref[...] = (y_ref[...][:, None, :] + xz_ref[...][None, :, :]).astype(o_ref.dtype)


# --------------------------------------------------------------------------- wrapper


def _cdiv(a, b):
    return -(-a // b)


def _round_up(x, m):
    return _cdiv(x, m) * m


def _pick_tile_rows(h, d, budget_bytes, per_row_bytes, fixed_bytes):
    """Largest 8-aligned h-tile whose (double-buffered, padded) VMEM footprint fits."""
    cap = max(1, (budget_bytes - fixed_bytes) // max(1, per_row_bytes))
    if cap >= h:
        th = h
    else:
        th = min(h, max(8, (cap // 8) * 8))
    # Guarantee >= 2 grid steps so v7x megacore can shard the writeback across both cores.
    if d * _cdiv(h, th) < 2 and h > 8:
        th = min(h, max(8, _round_up(_cdiv(h, 2), 8)))
    return th


def learned_positional_embedding_3d(scan, row_embed_w, col_embed_w, depth_embed_w,
                                    *, vmem_budget_bytes=32 * 1024 * 1024):
    """scan: (d, embed, h, w) -- only its shape is used (matches the PyTorch module).
    row_embed_w:   (max_width,  C2), indexed by arange(h)   (y part)
    col_embed_w:   (max_height, C1), indexed by arange(w)   (x part)
    depth_embed_w: (max_depth,  C3), indexed by arange(d)   (z part)
    Returns pos of shape (d, h, w, C1 + C2 + C3) == (d, h, w, embedding_dim)."""
    d, _, h, w = scan.shape
    c1 = col_embed_w.shape[1]     # x channels
    c2 = row_embed_w.shape[1]     # y channels
    c3 = depth_embed_w.shape[1]   # z channels
    emb = c1 + c2 + c3
    dtype = jnp.result_type(row_embed_w.dtype, col_embed_w.dtype, depth_embed_w.dtype)
    itemsize = jnp.dtype(dtype).itemsize

    # Embedding lookup of arange indices == leading-row slice of each table (tiny, no gather).
    x_emb = col_embed_w[:w].astype(dtype)      # (w, c1)
    y_emb = row_embed_w[:h].astype(dtype)      # (h, c2)
    z_emb = depth_embed_w[:d].astype(dtype)    # (d, c3)

    # Zero-place each table into its channel slot: concatenation becomes an exact add.
    xt = jnp.concatenate([x_emb, jnp.zeros((w, c2 + c3), dtype)], axis=1)                        # (w, emb)
    yt = jnp.concatenate([jnp.zeros((h, c1), dtype), y_emb, jnp.zeros((h, c3), dtype)], axis=1)  # (h, emb)
    zt = jnp.concatenate([jnp.zeros((d, c1 + c2), dtype), z_emb], axis=1)                        # (d, emb)

    lane_dense = (emb % 128) != 0

    if lane_dense:
        # Fold w into the lane dimension -> full-width unmasked stores, contiguous writeback.
        wemb = w * emb
        y_in = jnp.tile(yt, (1, w))                                      # (h, w*emb)
        xz_in = (jnp.tile(zt, (1, w)) + xt.reshape(1, wemb))[:, None]    # (d, 1, w*emb)

        lane_bytes = _round_up(wemb, 128) * itemsize
        per_row = 4 * lane_bytes                  # out block + y block, both double-buffered
        fixed = 2 * 8 * lane_bytes                # xz row (sublane-padded to 8), double-buffered
        th = _pick_tile_rows(h, d, vmem_budget_bytes, per_row, fixed)
        grid = (_cdiv(h, th), d)                  # depth fastest -> y block reused across d

        kernel = _pos3d_dense_kernel
        in_specs = [
            pl.BlockSpec((None, 1, wemb), lambda hi, zi: (zi, 0, 0)),    # xz row for depth zi
            pl.BlockSpec((th, wemb), lambda hi, zi: (hi, 0)),            # y tile for h-tile hi
        ]
        out_specs = pl.BlockSpec((None, th, wemb), lambda hi, zi: (zi, hi, 0))
        out_shape = jax.ShapeDtypeStruct((d, h, wemb), dtype)
        operands = (xz_in, y_in)
        input_bytes = (d + h) * wemb * itemsize
    else:
        # emb already lane-aligned: natural layout already gives full-width stores.
        xz_in = zt[:, None, :] + xt[None, :, :]                          # (d, w, emb)

        per_row = 2 * (w + 1) * emb * itemsize    # out rows + y rows, double-buffered
        fixed = 2 * _round_up(w, 8) * emb * itemsize
        th = _pick_tile_rows(h, d, vmem_budget_bytes, per_row, fixed)
        grid = (_cdiv(h, th), d)

        kernel = _pos3d_wide_kernel
        in_specs = [
            pl.BlockSpec((None, w, emb), lambda hi, zi: (zi, 0, 0)),     # x+z plane for depth zi
            pl.BlockSpec((th, emb), lambda hi, zi: (hi, 0)),             # y rows for h-tile hi
        ]
        out_specs = pl.BlockSpec((None, th, w, emb), lambda hi, zi: (zi, hi, 0, 0))
        out_shape = jax.ShapeDtypeStruct((d, h, w, emb), dtype)
        operands = (xz_in, yt)
        input_bytes = (d * w + h) * emb * itemsize

    total_live = th * per_row + fixed
    vmem_limit = int(max(32 << 20, min(total_live + (4 << 20), 96 << 20)))

    out_bytes = d * h * w * emb * itemsize
    cost = pl.CostEstimate(flops=d * h * w * emb, transcendentals=0,
                           bytes_accessed=out_bytes + input_bytes)

    pos = pl.pallas_call(
        kernel,
        out_shape=out_shape,
        grid_spec=pltpu.PrefetchScalarGridSpec(
            num_scalar_prefetch=0,
            grid=grid,
            in_specs=in_specs,
            out_specs=out_specs,
        ),
        compiler_params=pltpu.CompilerParams(
            dimension_semantics=("parallel", "parallel"),
            vmem_limit_bytes=vmem_limit),
        cost_estimate=cost,
    )(*operands)

    if lane_dense:
        pos = pos.reshape(d, h, w, emb)   # contiguous, free metadata reshape
    return pos


# --------------------------------------------------------------------------- validation


def _reference(row_w, col_w, dep_w, d, h, w):
    """Pure numpy re-implementation of the PyTorch forward."""
    c1 = col_w.shape[1]
    c2 = row_w.shape[1]
    c3 = dep_w.shape[1]
    x_emb = col_w[:w]
    y_emb = row_w[:h]
    z_emb = dep_w[:d]
    xb = np.broadcast_to(x_emb[None, None, :, :], (d, h, w, c1))
    yb = np.broadcast_to(y_emb[None, :, None, :], (d, h, w, c2))
    zb = np.broadcast_to(z_emb[:, None, None, :], (d, h, w, c3))
    return np.concatenate([xb, yb, zb], axis=-1)


def _run_case(embedding_dim, max_dims, dims, key):
    max_depth, max_height, max_width = max_dims
    d, h, w = dims
    c2 = embedding_dim // 3 + int(embedding_dim % 3 > 0)     # row_embed width  (y part)
    c1 = embedding_dim // 3 + int(embedding_dim % 3 == 2)    # col_embed width  (x part)
    c3 = embedding_dim // 3                                  # depth_embed width (z part)

    k1, k2, k3, k4 = jax.random.split(key, 4)
    # nn.init.uniform_ -> U[0, 1)
    row_w = jax.random.uniform(k1, (max_width, c2), dtype=jnp.float32)
    col_w = jax.random.uniform(k2, (max_height, c1), dtype=jnp.float32)
    dep_w = jax.random.uniform(k3, (max_depth, c3), dtype=jnp.float32)
    scan = jax.random.normal(k4, (d, embedding_dim, h, w), dtype=jnp.float32)

    pos = jax.block_until_ready(
        learned_positional_embedding_3d(scan, row_w, col_w, dep_w))

    ref = _reference(np.asarray(row_w), np.asarray(col_w), np.asarray(dep_w), d, h, w)
    assert pos.shape == (d, h, w, embedding_dim), (pos.shape, (d, h, w, embedding_dim))
    assert pos.dtype == jnp.float32
    np.testing.assert_allclose(np.asarray(pos), ref, rtol=0, atol=0)


if __name__ == "__main__":
    root = jax.random.PRNGKey(0)
    key_a, key_b = jax.random.split(root)

    # Lane-dense path: emb=32 (% 128 != 0), uneven 11/11/10 channel split.
    _run_case(32, (40, 64, 64), (4, 16, 16), key_a)
    # Pre-aligned path: emb=128 (% 128 == 0), 43/43/42 split, non-multiple-of-8 h.
    _run_case(128, (8, 32, 32), (2, 12, 8), key_b)

    print("KERNEL_OK")
</pallas_src>

<mosaic_0001>
module attributes {stable_mosaic.version = 11 : i64} {
  func.func @_pos3d_dense_kernel(%arg0: i32, %arg1: i32, %arg2: memref<1x1x512xf32, #tpu.memory_space<vmem>>, %arg3: memref<16x512xf32, #tpu.memory_space<vmem>>, %arg4: memref<1x16x512xf32, #tpu.memory_space<vmem>>) attributes {dimension_semantics = [#tpu.dimension_semantics<parallel>, #tpu.dimension_semantics<parallel>], iteration_bounds = array<i64: 1, 4>, scalar_prefetch = 0 : i64, scratch_operands = 0 : i64, tpu.core_type = #tpu.core_type<tc>, window_params = [{transform_indices = @transform_0, window_bounds = array<i64: 1, 1, 512>}, {transform_indices = @transform_1, window_bounds = array<i64: 16, 512>}, {transform_indices = @transform_2, window_bounds = array<i64: 1, 16, 512>}]} {
    %c0 = arith.constant 0 : index
    %c0_0 = arith.constant 0 : index
    %0 = vector.load %arg3[%c0, %c0_0] : memref<16x512xf32, #tpu.memory_space<vmem>>, vector<16x512xf32>
    %c0_1 = arith.constant 0 : index
    %c0_2 = arith.constant 0 : index
    %c0_3 = arith.constant 0 : index
    %1 = vector.load %arg2[%c0_1, %c0_2, %c0_3] : memref<1x1x512xf32, #tpu.memory_space<vmem>>, vector<1x1x512xf32>
    %2 = vector.shape_cast %1 : vector<1x1x512xf32> to vector<1x512xf32>
    %3 = vector.broadcast %2 : vector<1x512xf32> to vector<16x512xf32>
    %4 = arith.addf %0, %3 : vector<16x512xf32>
    %c0_4 = arith.constant 0 : index
    %c0_5 = arith.constant 0 : index
    %c0_6 = arith.constant 0 : index
    %5 = vector.load %arg4[%c0_4, %c0_5, %c0_6] : memref<1x16x512xf32, #tpu.memory_space<vmem>>, vector<1x16x512xf32>
    %6 = vector.shape_cast %5 : vector<1x16x512xf32> to vector<16x512xf32>
    %7 = vector.shape_cast %4 : vector<16x512xf32> to vector<1x16x512xf32>
    tpu.vector_store %arg4[%c0_4, %c0_5, %c0_6], %7 {strides = array<i32>} : memref<1x16x512xf32, #tpu.memory_space<vmem>>, vector<1x16x512xf32>,
    return
  }
  func.func @transform_0(%arg0: i32, %arg1: i32) -> (i32, i32, i32) {
    %c0_i32 = arith.constant 0 : i32
    %c0_i32_0 = arith.constant 0 : i32
    %c0_i32_1 = arith.constant 0 : i32
    return %arg1, %c0_i32, %c0_i32_0 : i32, i32, i32
  }
  func.func @transform_1(%arg0: i32, %arg1: i32) -> (i32, i32) {
    %c0_i32 = arith.constant 0 : i32
    %c0_i32_0 = arith.constant 0 : i32
    return %arg0, %c0_i32 : i32, i32
  }
  func.func @transform_2(%arg0: i32, %arg1: i32) -> (i32, i32, i32) {
    %c0_i32 = arith.constant 0 : i32
    %c0_i32_0 = arith.constant 0 : i32
    return %arg1, %arg0, %c0_i32 : i32, i32, i32
  }
}

</mosaic_0001>

<llo_original>
// kernel: tpu_custom_call.1
$region0: #{tpu_custom_call.1}
  #allocation0 [shape = 'u32[]', space=smem, size = 0x4, offset = 0x4, fixed_abs, tag = 'smem constant byte address 0x4 - core index']
  #allocation1 [shape = 'u32[72,128]{1,0:T(1,128)}', space=vmem, size = 0x9000, scoped, tag = 'internal scratch']
  %s0 = inlined_call_operand.hbm [shape: f32[4,1,512], index: 0, kind: input, shape index: {}]
  %s1 = inlined_call_operand.hbm [shape: f32[16,512], index: 1, kind: input, shape index: {}]
  %s2 = inlined_call_operand.hbm [shape: f32[4,16,512], index: 2, kind: output, shape index: {}]
  %s3 = sld [smem:[#allocation0]]
  $region49: #{tpu_custom_call.1} parent=0
    _
  %s5 = ssub.s32 1, %s3
  %s6 = scalar_select 0, %s5, %s3
  $region1: #{tpu_custom_call.1} parent=0
    #allocation2 [shape = 'u8[4096]{0}', space=vmem, size = 0x1000, scoped, tag = 'input window, operand 0']
    #allocation3 [shape = 's32[2]{0}', space=sflag, size = 0x8, scoped, tag = 'scoped memory for tpu_custom_call.1']
    #allocation4 [shape = 's32[2]{0}', space=sflag, size = 0x8, scoped, tag = 'scoped memory for tpu_custom_call.1']
    #allocation5 [shape = 'u8[32768]{0}', space=vmem, size = 0x8000, scoped, tag = 'input window, operand 1, single buffered']
    #allocation6 [shape = 's32[1]{0}', space=sflag, size = 0x4, scoped, tag = 'scoped memory for tpu_custom_call.1']
    #allocation7 [shape = 'u8[65536]{0}', space=vmem, size = 0x10000, scoped, tag = 'output window, operand 0']
    %7 = vsyncpa [#allocation3], 0
    %s8 = scalar_lea.sflag [#allocation3], 1
    %9 = vsyncpa %s8, 0
    %10 = vsyncpa [#allocation6], 0
    %11 = vsyncpa [#allocation4], 0
    %s12 = scalar_lea.sflag [#allocation4], 1
    %13 = vsyncpa %s12, 0
    loop: start=0, step=1, limit=6
    $region2: #{tpu_custom_call.1} parent=1 // loop_pre_header
      _
    $region3: #{tpu_custom_call.1} parent=1 // loop_header
      %s15 = sphi 0, %s19
      %p16 = scmp.ge.s32.totalorder %s15, 6
      %s22 = sphi 0, %s34
      %s23 = sphi 0, %s30
      %s24 = sphi 0, %s22
      %s25 = sphi 0, %s23
      %s26 = sphi 0, %s24
      %s27 = sphi 0, %s25
      %s37 = sphi 0, %s39
      %s40 = sphi 0, %s37
      %s41 = sphi 0, %s40
      %s57 = sphi 0, %s41
      %s63 = sphi 0, %s65
      %s66 = sphi 0, %s63
      %s67 = sphi 0, %s66
      %s83 = sphi 0, %s67
      %s91 = sphi 0, %s93
      %s94 = sphi 0, %s91
      %s95 = sphi 0, %s94
      %s111 = sphi 0, %s95
    $region4: #{tpu_custom_call.1} parent=1 // loop_header_branch
      %18 = sbr.rel (%p16) target = $region8
    $region5: #{tpu_custom_call.1} parent=1 // loop_body
      %s20 = ssub.s32 %s15, 1
      %s21 = ssub.s32 %s15, 2
      %s28 = sadd.s32 1, %s23
      %p29 = scmp.ge.s32.totalorder %s28, 4
      %s30 = scalar_select %p29, 0, %s28
      %s31 = sadd.s32 1, %s22
      %s32 = scalar_select %p29, %s31, %s22
      %p33 = scmp.ge.s32.totalorder %s32, 1
      %s34 = scalar_select %p33, 0, %s32
      %s35 = ssub.s32 %s23, %s30
      %p36 = scmp.eq.s32.totalorder %s35, 0
      %s38 = sadd.s32 %s37, 1
      %s39 = scalar_select %p36, %s37, %s38
      %p42 = pneg %p36
      %p43 = scmp.eq.s32.totalorder %s15, 3
      %p44 = por %p42, %p43
      %p45 = scmp.ne.s32.totalorder %s37, %s40
      %p46 = scmp.eq.s32.totalorder %s15, 0
      %p47 = por %p45, %p46
      %p48 = scmp.ne.s32.totalorder %s37, %s40
      %p49 = scmp.eq.s32.totalorder %s20, 3
      %p50 = por %p48, %p49
      %p51 = scmp.ne.s32.totalorder %s40, %s41
      %p52 = scmp.eq.s32.totalorder %s20, 0
      %p53 = por %p51, %p52
      %p54 = scmp.ne.s32.totalorder %s40, %s41
      %p55 = scmp.eq.s32.totalorder %s21, 3
      %p56 = por %p54, %p55
      %p58 = scmp.ne.s32.totalorder %s41, %s57
      %p59 = scmp.eq.s32.totalorder %s21, 0
      %p60 = por %p58, %p59
      %s61 = ssub.s32 %s22, %s34
      %p62 = scmp.eq.s32.totalorder %s61, 0
      %s64 = sadd.s32 %s63, 1
      %s65 = scalar_select %p62, %s63, %s64
      %p68 = pneg %p62
      %p69 = scmp.eq.s32.totalorder %s15, 3
      %p70 = por %p68, %p69
      %p71 = scmp.ne.s32.totalorder %s63, %s66
      %p72 = scmp.eq.s32.totalorder %s15, 0
      %p73 = por %p71, %p72
      %p74 = scmp.ne.s32.totalorder %s63, %s66
      %p75 = scmp.eq.s32.totalorder %s20, 3
      %p76 = por %p74, %p75
      %p77 = scmp.ne.s32.totalorder %s66, %s67
      %p78 = scmp.eq.s32.totalorder %s20, 0
      %p79 = por %p77, %p78
      %p80 = scmp.ne.s32.totalorder %s66, %s67
      %p81 = scmp.eq.s32.totalorder %s21, 3
      %p82 = por %p80, %p81
      %p84 = scmp.ne.s32.totalorder %s67, %s83
      %p85 = scmp.eq.s32.totalorder %s21, 0
      %p86 = por %p84, %p85
      %s87 = ssub.s32 %s23, %s30
      %s88 = ssub.s32 %s22, %s34
      %s89 = sor.u32 %s87, %s88
      %p90 = scmp.eq.s32.totalorder %s89, 0
      %s92 = sadd.s32 %s91, 1
      %s93 = scalar_select %p90, %s91, %s92
      %p96 = pneg %p90
      %p97 = scmp.eq.s32.totalorder %s15, 3
      %p98 = por %p96, %p97
      %p99 = scmp.ne.s32.totalorder %s91, %s94
      %p100 = scmp.eq.s32.totalorder %s15, 0
      %p101 = por %p99, %p100
      %p102 = scmp.ne.s32.totalorder %s91, %s94
      %p103 = scmp.eq.s32.totalorder %s20, 3
      %p104 = por %p102, %p103
      %p105 = scmp.ne.s32.totalorder %s94, %s95
      %p106 = scmp.eq.s32.totalorder %s20, 0
      %p107 = por %p105, %p106
      %p108 = scmp.ne.s32.totalorder %s94, %s95
      %p109 = scmp.eq.s32.totalorder %s21, 3
      %p110 = por %p108, %p109
      %p112 = scmp.ne.s32.totalorder %s95, %s111
      %p113 = scmp.eq.s32.totalorder %s21, 0
      %p114 = por %p112, %p113
      %p115 = scmp.le.s32.totalorder 1, %s15
      %p116 = scmp.lt.s32.totalorder %s15, 5
      %p117 = pnand %p115, %p116
      %p118 = pneg %p117
      // Predicated region
      $region9: #{tpu_custom_call.1} parent=5 // pred_check
        _
      $region10: #{tpu_custom_call.1} parent=5 // pred_check_branch
        %120 = sbr.rel (%p117) target = $region12
      $region11: #{tpu_custom_call.1} parent=5 // pred_region
        %s121 = ssub.s32 %s15, 1
        // Predicated region
        $region13: #{tpu_custom_call.1} parent=11 // pred_check
          %p122 = pneg %p79
        $region14: #{tpu_custom_call.1} parent=11 // pred_check_branch
          %124 = sbr.rel (%p122) target = $region16
        $region15: #{tpu_custom_call.1} parent=11 // pred_region
          %s125 = smul.u32 2, %s24
          %127 = vsyncadd [#allocation6], 0
          %s128 = smul.addr %s125, 4
          %s129 = smul.addr %s128, 8
          %s130 = scalar_lea.hbm %s1, %s129
          %s131 = sshll.u32 %s130, 4
          %s132 = int_to_ptr.hbm [resolvable:$true] %s131
          %s133 = sshll.u32 [#allocation5], 4
          %s134 = int_to_ptr.vmem [resolvable:$true] %s133
          %139 = dma.hbm_to_vmem [thread:$0]  %s132, 1024, %s134, [#allocation6], 512, 512, 32
        $region16: #{tpu_custom_call.1} parent=11 // pred_fallthru
          _
      $region12: #{tpu_custom_call.1} parent=5 // pred_fallthru
        _
      %p140 = scmp.lt.s32.totalorder %s15, 4
      // Predicated region
      $region17: #{tpu_custom_call.1} parent=5 // pred_check
        %p141 = pneg %p140
      $region18: #{tpu_custom_call.1} parent=5 // pred_check_branch
        %143 = sbr.rel (%p141) target = $region20
      $region19: #{tpu_custom_call.1} parent=5 // pred_region
        // Predicated region
        $region21: #{tpu_custom_call.1} parent=19 // pred_check
          %p144 = pneg %p47
        $region22: #{tpu_custom_call.1} parent=19 // pred_check_branch
          %146 = sbr.rel (%p144) target = $region24
        $region23: #{tpu_custom_call.1} parent=19 // pred_region
          %s147 = sand.u32 %s37, 1
          %s148 = scalar_lea.sflag [#allocation3], %s147
          %s149 = sand.u32 %s37, 1
          %s150 = smul.addr %s149, 4
          %s151 = scalar_lea.vmem [#allocation2], %s150
          %153 = vsyncadd %s148, 0
          %s154 = smul.addr %s23, 4
          %s155 = scalar_lea.hbm %s0, %s154
          %s157 = sshll.u32 %s155, 4
          %s158 = int_to_ptr.hbm [resolvable:$true] %s157
          %s159 = sshll.u32 %s151, 4
          %s160 = int_to_ptr.vmem [resolvable:$true] %s159
          %162 = dma.hbm_to_vmem [thread:$0]  %s158, 64, %s160, %s148
        $region24: #{tpu_custom_call.1} parent=19 // pred_fallthru
          _
      $region20: #{tpu_custom_call.1} parent=5 // pred_fallthru
        _
      %p163 = scmp.le.s32.totalorder 1, %s15
      %p164 = scmp.lt.s32.totalorder %s15, 5
      %p165 = pnand %p163, %p164
      %p166 = pneg %p165
      // Predicated region
      $region25: #{tpu_custom_call.1} parent=5 // pred_check
        _
      $region26: #{tpu_custom_call.1} parent=5 // pred_check_branch
        %168 = sbr.rel (%p165) target = $region28
      $region27: #{tpu_custom_call.1} parent=5 // pred_region
        %s169 = ssub.s32 %s15, 1
        %s170 = sand.u32 %s40, 1
        %s171 = scalar_lea.sflag [#allocation3], %s170
        %s172 = sand.u32 %s40, 1
        %s173 = smul.addr %s172, 4
        %s174 = scalar_lea.vmem [#allocation2], %s173
        // Predicated region
        $region29: #{tpu_custom_call.1} parent=27 // pred_check
          %p175 = pneg %p53
        $region30: #{tpu_custom_call.1} parent=27 // pred_check_branch
          %177 = sbr.rel (%p175) target = $region32
        $region31: #{tpu_custom_call.1} parent=27 // pred_region
          %179 = dma.done %s171, 64
        $region32: #{tpu_custom_call.1} parent=27 // pred_fallthru
          _
        // Predicated region
        $region33: #{tpu_custom_call.1} parent=27 // pred_check
          %p180 = pneg %p79
        $region34: #{tpu_custom_call.1} parent=27 // pred_check_branch
          %182 = sbr.rel (%p180) target = $region36
        $region35: #{tpu_custom_call.1} parent=27 // pred_region
          %184 = dma.done [#allocation6], 1024
        $region36: #{tpu_custom_call.1} parent=27 // pred_fallthru
          _
        %s185 = sand.u32 %s40, 1
        %s186 = scalar_lea.sflag [#allocation3], %s185
        %s187 = sand.u32 %s40, 1
        %s188 = smul.addr %s187, 4
        %s189 = scalar_lea.vmem [#allocation2], %s188
        %p190 = pneg %p53
        %p191 = pneg %p50
        %p192 = pneg %p79
        %p193 = pneg %p76
        %p194 = pneg %p107
        %p195 = pneg %p104
        %s196 = sand.u32 %s94, 1
        %s197 = scalar_lea.sflag [#allocation4], %s196
        %s198 = sand.u32 %s94, 1
        %s199 = smul.addr %s198, 64
        %s200 = scalar_lea.vmem [#allocation7], %s199
        %s201 = smul.u32 2, %s24
        %s202 = smul.u32 2, %s24
        %v203 = vld [vmem:[#allocation5] sm:$0xff]
        %v204 = vld [vmem:[#allocation5 + $0x8] sm:$0xff]
        %v205 = vld [vmem:[#allocation5 + $0x10] sm:$0xff]
        %v206 = vld [vmem:[#allocation5 + $0x18] sm:$0xff]
        %v207 = vld [vmem:[#allocation5 + $0x20] sm:$0xff]
        %v208 = vld [vmem:[#allocation5 + $0x28] sm:$0xff]
        %v209 = vld [vmem:[#allocation5 + $0x30] sm:$0xff]
        %v210 = vld [vmem:[#allocation5 + $0x38] sm:$0xff]
        %v211 = vld [vmem:[%s174] sm:$0xf]
        %v213 = vperm.slane %v211, 0
        %v214 = vperm.slane %v211, 1
        %v215 = vperm.slane %v211, 2
        %v216 = vperm.slane %v211, 3
        %v221 = vadd.f32 %v203, %v213
        %v222 = vadd.f32 %v204, %v214
        %v223 = vadd.f32 %v205, %v215
        %v224 = vadd.f32 %v206, %v216
        %v225 = vadd.f32 %v207, %v213
        %v226 = vadd.f32 %v208, %v214
        %v227 = vadd.f32 %v209, %v215
        %v228 = vadd.f32 %v210, %v216
        %229 = vst [vmem:[%s200] sm:$0xff] %v221
        %230 = vst [vmem:[%s200 + $0x8] sm:$0xff] %v222
        %231 = vst [vmem:[%s200 + $0x10] sm:$0xff] %v223
        %232 = vst [vmem:[%s200 + $0x18] sm:$0xff] %v224
        %233 = vst [vmem:[%s200 + $0x20] sm:$0xff] %v225
        %234 = vst [vmem:[%s200 + $0x28] sm:$0xff] %v226
        %235 = vst [vmem:[%s200 + $0x30] sm:$0xff] %v227
        %236 = vst [vmem:[%s200 + $0x38] sm:$0xff] %v228
        %s237 = sand.u32 %s94, 1
        %s238 = scalar_lea.sflag [#allocation4], %s237
        %s239 = sand.u32 %s94, 1
        %s240 = smul.addr %s239, 64
        %s241 = scalar_lea.vmem [#allocation7], %s240
        // Predicated region
        $region37: #{tpu_custom_call.1} parent=27 // pred_check
          %p242 = pneg %p104
        $region38: #{tpu_custom_call.1} parent=27 // pred_check_branch
          %244 = sbr.rel (%p242) target = $region40
        $region39: #{tpu_custom_call.1} parent=27 // pred_region
          %s245 = smul.u32 2, %s24
          %247 = vsyncadd %s238, 0
          %s248 = smul.addr %s245, 4
          %s249 = smul.addr %s25, 8
          %s250 = sadd.s32 %s248, %s249
          %s251 = smul.addr %s250, 8
          %s252 = scalar_lea.hbm %s2, %s251
          %s253 = sshll.u32 %s241, 4
          %s254 = int_to_ptr.vmem [resolvable:$true] %s253
          %s255 = sshll.u32 %s252, 4
          %s256 = int_to_ptr.hbm [resolvable:$true] %s255
          %261 = dma.vmem_to_hbm [thread:$0]  %s254, 1024, %s256, %s238, 512, 512, 32
        $region40: #{tpu_custom_call.1} parent=27 // pred_fallthru
          _
      $region28: #{tpu_custom_call.1} parent=5 // pred_fallthru
        _
      %p262 = scmp.le.s32.totalorder 2, %s15
      // Predicated region
      $region41: #{tpu_custom_call.1} parent=5 // pred_check
        %p263 = pneg %p262
      $region42: #{tpu_custom_call.1} parent=5 // pred_check_branch
        %265 = sbr.rel (%p263) target = $region44
      $region43: #{tpu_custom_call.1} parent=5 // pred_region
        %s266 = ssub.s32 %s15, 2
        // Predicated region
        $region45: #{tpu_custom_call.1} parent=43 // pred_check
          %p267 = pneg %p110
        $region46: #{tpu_custom_call.1} parent=43 // pred_check_branch
          %269 = sbr.rel (%p267) target = $region48
        $region47: #{tpu_custom_call.1} parent=43 // pred_region
          %s270 = sand.u32 %s95, 1
          %s271 = scalar_lea.sflag [#allocation4], %s270
          %s272 = sand.u32 %s95, 1
          %s273 = smul.addr %s272, 64
          %s274 = scalar_lea.vmem [#allocation7], %s273
          %276 = dma.done %s271, 1024
        $region48: #{tpu_custom_call.1} parent=43 // pred_fallthru
          _
      $region44: #{tpu_custom_call.1} parent=5 // pred_fallthru
        _
    $region6: #{tpu_custom_call.1} parent=1 // loop_footer
      %s19 = sadd.s32 1, %s15
    $region7: #{tpu_custom_call.1} parent=1 // loop_footer_branch
      %14 = sbr.rel target = $region3
    $region8: #{tpu_custom_call.1} parent=1 // loop_exit
      _
    %277 = vsyncpa [#allocation3], 1
    %s278 = scalar_lea.sflag [#allocation3], 1
    %279 = vsyncpa %s278, 1
    %280 = vsyncpa [#allocation6], 1
    %281 = vsyncpa [#allocation4], 1
    %s282 = scalar_lea.sflag [#allocation4], 1
    %283 = vsyncpa %s282, 1

</llo_original>
